<compile_context>
chip_gen: v5e
topology: v5e:2x2
jax: 0.10.0
libtpu: 0.0.40
codegen_flags: <defaults>
</compile_context>

<pallas_src>
import functools

import jax
import jax.numpy as jnp
from jax import lax
from jax.experimental import pallas as pl
from jax.experimental.pallas import tpu as pltpu


def _greedy_head_kernel(x_ref, out_ref, max_sc, *, vocab_size):
    t = pl.program_id(1)                       # vocab (reduction) axis
    tile = x_ref[...]                          # native dtype (no upcast; cast is monotone)
    TR, TV = tile.shape

    local_col = lax.broadcasted_iota(jnp.int32, (TR, TV), 1)

    if vocab_size % TV != 0:
        # Tail tile contains out-of-range lanes (unspecified data); mask them with -inf
        # so they can never win the argmax.  Python-level branch: V and TV are static,
        # so kernels with an exact tiling pay nothing.
        limit = vocab_size - t * TV            # scalar; only the last tile has limit < TV
        neg_inf = jnp.array(-jnp.inf, dtype=tile.dtype)
        tile = jnp.where(local_col < limit, tile, neg_inf)

    tile_max = jnp.max(tile, axis=-1, keepdims=True)                    # (TR, 1)
    # First (lowest) column achieving the tile max -> first-occurrence tie-break.
    sentinel = jnp.int32(TV)                   # can only win if a row has no match (all-NaN)
    local_idx = jnp.min(jnp.where(tile == tile_max, local_col, sentinel),
                        axis=-1, keepdims=True)                         # (TR, 1)
    global_idx = local_idx + t * TV            # scalar offset added to (TR,1), not (TR,TV)
    tile_max_f32 = tile_max.astype(jnp.float32)

    @pl.when(t == 0)
    def _():
        max_sc[...] = tile_max_f32
        out_ref[...] = global_idx

    @pl.when(t > 0)
    def _():
        better = tile_max_f32 > max_sc[...]    # strict: earlier tile wins ties
        max_sc[...] = jnp.where(better, tile_max_f32, max_sc[...])
        out_ref[...] = jnp.where(better, global_idx, out_ref[...])


def greedy_head(m_logits, *, row_tile=None, vocab_tile=None):
    """argmax over the last axis; returns leading_dims + (1,), int32."""
    *lead, V = m_logits.shape
    R = 1
    for d in lead:
        R *= d
    R = max(R, 1)
    x = m_logits.reshape(R, V)
    if not jnp.issubdtype(x.dtype, jnp.floating):
        x = x.astype(jnp.float32)              # mirrors torch's .float() for non-float inputs
    itemsize = jnp.dtype(x.dtype).itemsize

    try:
        vmem_cap = int(pltpu.get_tpu_info().vmem_capacity_bytes)
    except Exception:
        vmem_cap = 64 << 20                    # conservative fallback (v7x physical per TC)

    # --- Row tiling (sublane axis): bound block size for prefill-sized R. -------------
    if row_tile is not None:
        TR = int(row_tile)
    elif R <= 256:
        TR = R                                 # full dim: always layout-legal
    else:
        TR = 256                               # multiple of 8

    # --- Vocab tiling (lane axis, reduction): MiB-scale, generation-aware. ------------
    V128 = ((V + 127) // 128) * 128
    if vocab_tile is not None:
        TV = max(128, min(((int(vocab_tile) + 127) // 128) * 128, V128))
    else:
        budget = max(vmem_cap // 8, 2 << 20)   # budget for the double-buffered input block
        tv_budget = budget // (2 * TR * itemsize)
        tv_budget = max(128, (tv_budget // 128) * 128)
        TV = min(V128, tv_budget, 32768)
        if V128 // TV < 4:                     # keep >= ~4 tiles so DMA overlaps the reduce
            tv_quarter = ((pl.cdiv(V, 4) + 127) // 128) * 128
            TV = max(128, min(TV, max(tv_quarter, 512)))
        TV = max(128, min(TV, V128))

    n_row = pl.cdiv(R, TR)
    n_voc = pl.cdiv(V, TV)

    needed = 2 * TR * TV * itemsize + (2 << 20)
    vmem_limit = int(min(max(needed, 32 << 20), max(vmem_cap - (8 << 20), needed)))

    kernel = functools.partial(_greedy_head_kernel, vocab_size=V)
    token = pl.pallas_call(
        kernel,
        out_shape=jax.ShapeDtypeStruct((R, 1), jnp.int32),
        grid=(n_row, n_voc),
        in_specs=[pl.BlockSpec((TR, TV), lambda r, t: (r, t))],
        out_specs=pl.BlockSpec((TR, 1), lambda r, t: (r, 0)),
        scratch_shapes=[pltpu.VMEM((TR, 1), jnp.float32)],   # running max (f32 accumulator)
        compiler_params=pltpu.CompilerParams(
            dimension_semantics=("parallel", "arbitrary"),
            vmem_limit_bytes=vmem_limit,
        ),
        cost_estimate=pl.CostEstimate(
            flops=2 * R * V,
            transcendentals=0,
            bytes_accessed=R * V * itemsize + R * 4,
        ),
    )(x)
    return token.reshape(*lead, 1)


if __name__ == "__main__":
    key = jax.random.PRNGKey(0)
    k1, k2 = jax.random.split(key)

    # Decode-like logits: batch=2, seq=8, vocab=2048, f32.
    B, S, V = 2, 8, 2048
    m_logits = jax.random.normal(k1, (B, S, V), jnp.float32) * 3.0

    token = jax.jit(greedy_head)(m_logits)
    jax.block_until_ready(token)

    ref = jnp.argmax(m_logits.astype(jnp.float32), axis=-1, keepdims=True).astype(jnp.int32)
    assert token.shape == (B, S, 1)
    assert token.dtype == jnp.int32
    assert jnp.array_equal(token, ref)

    # Second check: vocab not a multiple of the tile (exercises in-kernel tail masking),
    # bf16 logits (native-dtype compute in the kernel), 2-D logits.
    V2 = 1000
    m_logits2 = (jax.random.normal(k2, (B, V2), jnp.float32) * 2.0).astype(jnp.bfloat16)
    token2 = jax.jit(greedy_head)(m_logits2)
    jax.block_until_ready(token2)
    ref2 = jnp.argmax(m_logits2.astype(jnp.float32), axis=-1, keepdims=True).astype(jnp.int32)
    assert token2.shape == (B, 1)
    assert jnp.array_equal(token2, ref2)

    print("KERNEL_OK")
</pallas_src>

<mosaic_0001>
module attributes {stable_mosaic.version = 11 : i64} {
  func.func @_greedy_head_kernel(%arg0: i32, %arg1: i32, %arg2: memref<16x512xf32, #tpu.memory_space<vmem>>, %arg3: memref<16x1xi32, #tpu.memory_space<vmem>>, %arg4: memref<16x1xf32, #tpu.memory_space<vmem>>) attributes {dimension_semantics = [#tpu.dimension_semantics<parallel>, #tpu.dimension_semantics<arbitrary>], iteration_bounds = array<i64: 1, 4>, scalar_prefetch = 0 : i64, scratch_operands = 1 : i64, tpu.core_type = #tpu.core_type<tc>, window_params = [{transform_indices = @transform_0, window_bounds = array<i64: 16, 512>}, {transform_indices = @transform_1, window_bounds = array<i64: 16, 1>}]} {
    %c0 = arith.constant 0 : index
    %c0_0 = arith.constant 0 : index
    %0 = vector.load %arg2[%c0, %c0_0] : memref<16x512xf32, #tpu.memory_space<vmem>>, vector<16x512xf32>
    %1 = tpu.iota {dimensions = array<i32: 1>} : vector<16x512xi32>
    %cst = arith.constant dense<0xFF800000> : vector<16xf32>
    %2 = vector.multi_reduction <maximumf>, %0, %cst [1] : vector<16x512xf32> to vector<16xf32>
    %3 = vector.shape_cast %2 : vector<16xf32> to vector<16x1xf32>
    %4 = vector.broadcast %3 : vector<16x1xf32> to vector<16x512xf32>
    %5 = arith.cmpf oeq, %0, %4 : vector<16x512xf32>
    %c512_i32 = arith.constant 512 : i32
    %6 = vector.broadcast %c512_i32 : i32 to vector<16x512xi32>
    %7 = arith.select %5, %1, %6 : vector<16x512xi1>, vector<16x512xi32>
    %cst_1 = arith.constant dense<2147483647> : vector<16xi32>
    %8 = vector.multi_reduction <minsi>, %7, %cst_1 [1] : vector<16x512xi32> to vector<16xi32>
    %9 = vector.shape_cast %8 : vector<16xi32> to vector<16x1xi32>
    %c512_i32_2 = arith.constant 512 : i32
    %10 = arith.muli %arg1, %c512_i32_2 : i32
    %11 = vector.broadcast %10 : i32 to vector<16x1xi32>
    %12 = arith.addi %9, %11 : vector<16x1xi32>
    %c0_i32 = arith.constant 0 : i32
    %13 = arith.cmpi eq, %arg1, %c0_i32 : i32
    %14 = arith.extui %13 : i1 to i32
    %c0_i32_3 = arith.constant 0 : i32
    %15 = arith.cmpi ne, %14, %c0_i32_3 : i32
    scf.if %15 {
      %c0_6 = arith.constant 0 : index
      %c0_7 = arith.constant 0 : index
      %19 = vector.load %arg4[%c0_6, %c0_7] : memref<16x1xf32, #tpu.memory_space<vmem>>, vector<16x1xf32>
      tpu.vector_store %arg4[%c0_6, %c0_7], %3 {strides = array<i32>} : memref<16x1xf32, #tpu.memory_space<vmem>>, vector<16x1xf32>,
      %c0_8 = arith.constant 0 : index
      %c0_9 = arith.constant 0 : index
      %20 = vector.load %arg3[%c0_8, %c0_9] : memref<16x1xi32, #tpu.memory_space<vmem>>, vector<16x1xi32>
      tpu.vector_store %arg3[%c0_8, %c0_9], %12 {strides = array<i32>} : memref<16x1xi32, #tpu.memory_space<vmem>>, vector<16x1xi32>,
    } else {
    }
    %c0_i32_4 = arith.constant 0 : i32
    %16 = arith.cmpi sgt, %arg1, %c0_i32_4 : i32
    %17 = arith.extui %16 : i1 to i32
    %c0_i32_5 = arith.constant 0 : i32
    %18 = arith.cmpi ne, %17, %c0_i32_5 : i32
    scf.if %18 {
      %c0_6 = arith.constant 0 : index
      %c0_7 = arith.constant 0 : index
      %19 = vector.load %arg4[%c0_6, %c0_7] : memref<16x1xf32, #tpu.memory_space<vmem>>, vector<16x1xf32>
      %20 = arith.cmpf ogt, %3, %19 : vector<16x1xf32>
      %c0_8 = arith.constant 0 : index
      %c0_9 = arith.constant 0 : index
      %21 = vector.load %arg4[%c0_8, %c0_9] : memref<16x1xf32, #tpu.memory_space<vmem>>, vector<16x1xf32>
      %22 = arith.select %20, %3, %21 : vector<16x1xi1>, vector<16x1xf32>
      %c0_10 = arith.constant 0 : index
      %c0_11 = arith.constant 0 : index
      %23 = vector.load %arg4[%c0_10, %c0_11] : memref<16x1xf32, #tpu.memory_space<vmem>>, vector<16x1xf32>
      tpu.vector_store %arg4[%c0_10, %c0_11], %22 {strides = array<i32>} : memref<16x1xf32, #tpu.memory_space<vmem>>, vector<16x1xf32>,
      %c0_12 = arith.constant 0 : index
      %c0_13 = arith.constant 0 : index
      %24 = vector.load %arg3[%c0_12, %c0_13] : memref<16x1xi32, #tpu.memory_space<vmem>>, vector<16x1xi32>
      %25 = arith.select %20, %12, %24 : vector<16x1xi1>, vector<16x1xi32>
      %c0_14 = arith.constant 0 : index
      %c0_15 = arith.constant 0 : index
      %26 = vector.load %arg3[%c0_14, %c0_15] : memref<16x1xi32, #tpu.memory_space<vmem>>, vector<16x1xi32>
      tpu.vector_store %arg3[%c0_14, %c0_15], %25 {strides = array<i32>} : memref<16x1xi32, #tpu.memory_space<vmem>>, vector<16x1xi32>,
    } else {
    }
    return
  }
  func.func @transform_0(%arg0: i32, %arg1: i32) -> (i32, i32) {
    %c0_i32 = arith.constant 0 : i32
    return %arg0, %arg1 : i32, i32
  }
  func.func @transform_1(%arg0: i32, %arg1: i32) -> (i32, i32) {
    %c0_i32 = arith.constant 0 : i32
    %c0_i32_0 = arith.constant 0 : i32
    return %arg0, %c0_i32 : i32, i32
  }
}

</mosaic_0001>

<llo_original>
// kernel: greedy_head.1
$region0: #{greedy_head.1}
  #allocation0 [shape = 'u32[]', space=smem, size = 0x4, offset = 0x4, fixed_abs, tag = 'smem constant byte address 0x4 - core index']
  #allocation1 [shape = 'u32[72,128]{1,0:T(1,128)}', space=vmem, size = 0x9000, scoped, tag = 'internal scratch']
  #allocation2 [shape = 'f32[16,1]{1,0:T(8,128)}', space=vmem, size = 0x2000, scoped, tag = 'scratch operand']
  %s0 = inlined_call_operand.hbm [shape: f32[16,2048], index: 0, kind: input, shape index: {}]
  %s1 = inlined_call_operand.vmem [shape: s32[16,1], index: 1, kind: output, shape index: {}]
  %s2 = sld [smem:[#allocation0]]
  $region49: #{greedy_head.1} parent=0
    _
  %s4 = ssub.s32 1, %s2
  %s5 = scalar_select 0, %s4, %s2
  $region1: #{greedy_head.1} parent=0
    #allocation3 [shape = 'u8[65536]{0}', space=vmem, size = 0x10000, scoped, tag = 'input window, operand 0']
    #allocation4 [shape = 's32[2]{0}', space=sflag, size = 0x8, scoped, tag = 'scoped memory for greedy_head.1']
    %6 = vsyncpa [#allocation4], 0
    %s7 = scalar_lea.sflag [#allocation4], 1
    %8 = vsyncpa %s7, 0
    loop: start=0, step=1, limit=6
    $region2: #{greedy_head.1} parent=1 // loop_pre_header
      _
    $region3: #{greedy_head.1} parent=1 // loop_header
      %s10 = sphi 0, %s14
      %p11 = scmp.ge.s32.totalorder %s10, 6
      %s17 = sphi 0, %s29
      %s18 = sphi 0, %s25
      %s19 = sphi 0, %s17
      %s20 = sphi 0, %s18
      %s21 = sphi 0, %s19
      %s22 = sphi 0, %s20
      %s34 = sphi 0, %s36
      %s37 = sphi 0, %s34
      %s38 = sphi 0, %s37
      %s54 = sphi 0, %s38
      %s60 = sphi 0, %s62
      %s63 = sphi 0, %s60
      %s64 = sphi 0, %s63
      %s80 = sphi 0, %s64
    $region4: #{greedy_head.1} parent=1 // loop_header_branch
      %13 = sbr.rel (%p11) target = $region8
    $region5: #{greedy_head.1} parent=1 // loop_body
      %s15 = ssub.s32 %s10, 1
      %s16 = ssub.s32 %s10, 2
      %s23 = sadd.s32 1, %s18
      %p24 = scmp.ge.s32.totalorder %s23, 4
      %s25 = scalar_select %p24, 0, %s23
      %s26 = sadd.s32 1, %s17
      %s27 = scalar_select %p24, %s26, %s17
      %p28 = scmp.ge.s32.totalorder %s27, 1
      %s29 = scalar_select %p28, 0, %s27
      %s30 = ssub.s32 %s17, %s29
      %s31 = ssub.s32 %s18, %s25
      %s32 = sor.u32 %s30, %s31
      %p33 = scmp.eq.s32.totalorder %s32, 0
      %s35 = sadd.s32 %s34, 1
      %s36 = scalar_select %p33, %s34, %s35
      %p39 = pneg %p33
      %p40 = scmp.eq.s32.totalorder %s10, 3
      %p41 = por %p39, %p40
      %p42 = scmp.ne.s32.totalorder %s34, %s37
      %p43 = scmp.eq.s32.totalorder %s10, 0
      %p44 = por %p42, %p43
      %p45 = scmp.ne.s32.totalorder %s34, %s37
      %p46 = scmp.eq.s32.totalorder %s15, 3
      %p47 = por %p45, %p46
      %p48 = scmp.ne.s32.totalorder %s37, %s38
      %p49 = scmp.eq.s32.totalorder %s15, 0
      %p50 = por %p48, %p49
      %p51 = scmp.ne.s32.totalorder %s37, %s38
      %p52 = scmp.eq.s32.totalorder %s16, 3
      %p53 = por %p51, %p52
      %p55 = scmp.ne.s32.totalorder %s38, %s54
      %p56 = scmp.eq.s32.totalorder %s16, 0
      %p57 = por %p55, %p56
      %s58 = ssub.s32 %s17, %s29
      %p59 = scmp.eq.s32.totalorder %s58, 0
      %s61 = sadd.s32 %s60, 1
      %s62 = scalar_select %p59, %s60, %s61
      %p65 = pneg %p59
      %p66 = scmp.eq.s32.totalorder %s10, 3
      %p67 = por %p65, %p66
      %p68 = scmp.ne.s32.totalorder %s60, %s63
      %p69 = scmp.eq.s32.totalorder %s10, 0
      %p70 = por %p68, %p69
      %p71 = scmp.ne.s32.totalorder %s60, %s63
      %p72 = scmp.eq.s32.totalorder %s15, 3
      %p73 = por %p71, %p72
      %p74 = scmp.ne.s32.totalorder %s63, %s64
      %p75 = scmp.eq.s32.totalorder %s15, 0
      %p76 = por %p74, %p75
      %p77 = scmp.ne.s32.totalorder %s63, %s64
      %p78 = scmp.eq.s32.totalorder %s16, 3
      %p79 = por %p77, %p78
      %p81 = scmp.ne.s32.totalorder %s64, %s80
      %p82 = scmp.eq.s32.totalorder %s16, 0
      %p83 = por %p81, %p82
      %p84 = scmp.le.s32.totalorder 1, %s10
      %p85 = scmp.lt.s32.totalorder %s10, 5
      %p86 = pnand %p84, %p85
      %p87 = pneg %p86
      // Predicated region
      $region9: #{greedy_head.1} parent=5 // pred_check
        _
      $region10: #{greedy_head.1} parent=5 // pred_check_branch
        %89 = sbr.rel (%p86) target = $region12
      $region11: #{greedy_head.1} parent=5 // pred_region
        %s90 = ssub.s32 %s10, 1
      $region12: #{greedy_head.1} parent=5 // pred_fallthru
        _
      %p91 = scmp.lt.s32.totalorder %s10, 4
      // Predicated region
      $region13: #{greedy_head.1} parent=5 // pred_check
        %p92 = pneg %p91
      $region14: #{greedy_head.1} parent=5 // pred_check_branch
        %94 = sbr.rel (%p92) target = $region16
      $region15: #{greedy_head.1} parent=5 // pred_region
        // Predicated region
        $region17: #{greedy_head.1} parent=15 // pred_check
          %p95 = pneg %p44
        $region18: #{greedy_head.1} parent=15 // pred_check_branch
          %97 = sbr.rel (%p95) target = $region20
        $region19: #{greedy_head.1} parent=15 // pred_region
          %s98 = sand.u32 %s34, 1
          %s99 = scalar_lea.sflag [#allocation4], %s98
          %s100 = sand.u32 %s34, 1
          %s101 = smul.addr %s100, 64
          %s102 = scalar_lea.vmem [#allocation3], %s101
          %s103 = smul.u32 2, %s17
          %s104 = smul.u32 4, %s18
          %106 = vsyncadd %s99, 0
          %s107 = smul.addr %s103, 16
          %s108 = sadd.s32 %s104, %s107
          %s109 = smul.addr %s108, 8
          %s110 = scalar_lea.hbm %s0, %s109
          %s111 = sshll.u32 %s110, 4
          %s112 = int_to_ptr.hbm [resolvable:$true] %s111
          %s113 = sshll.u32 %s102, 4
          %s114 = int_to_ptr.vmem [resolvable:$true] %s113
          %119 = dma.hbm_to_vmem [thread:$0]  %s112, 1024, %s114, %s99, 2048, 512, 32
        $region20: #{greedy_head.1} parent=15 // pred_fallthru
          _
      $region16: #{greedy_head.1} parent=5 // pred_fallthru
        _
      %p120 = scmp.le.s32.totalorder 1, %s10
      %p121 = scmp.lt.s32.totalorder %s10, 5
      %p122 = pnand %p120, %p121
      %p123 = pneg %p122
      // Predicated region
      $region21: #{greedy_head.1} parent=5 // pred_check
        _
      $region22: #{greedy_head.1} parent=5 // pred_check_branch
        %125 = sbr.rel (%p122) target = $region24
      $region23: #{greedy_head.1} parent=5 // pred_region
        %s126 = ssub.s32 %s10, 1
        %s127 = sand.u32 %s37, 1
        %s128 = scalar_lea.sflag [#allocation4], %s127
        %s129 = sand.u32 %s37, 1
        %s130 = smul.addr %s129, 64
        %s131 = scalar_lea.vmem [#allocation3], %s130
        // Predicated region
        $region25: #{greedy_head.1} parent=23 // pred_check
          %p132 = pneg %p50
        $region26: #{greedy_head.1} parent=23 // pred_check_branch
          %134 = sbr.rel (%p132) target = $region28
        $region27: #{greedy_head.1} parent=23 // pred_region
          %136 = dma.done %s128, 1024
        $region28: #{greedy_head.1} parent=23 // pred_fallthru
          _
        %s137 = sand.u32 %s37, 1
        %s138 = scalar_lea.sflag [#allocation4], %s137
        %s139 = sand.u32 %s37, 1
        %s140 = smul.addr %s139, 64
        %s141 = scalar_lea.vmem [#allocation3], %s140
        %p142 = pneg %p50
        %p143 = pneg %p47
        %p144 = pneg %p76
        %p145 = pneg %p73
        %s146 = smul.u32 2, %s19
        %p147 = scmp.lt.s32.totalorder %s146, 1
        %s148 = scalar_select %p147, %s146, 1
        %s149 = smul.addr %s148, 8
        %s150 = scalar_lea.vmem %s1, %s149
        %s151 = smul.u32 2, %s19
        %s152 = smul.u32 4, %s20
        %s153 = smul.u32 2, %s19
        %p154 = scmp.lt.s32.totalorder %s153, 1
        %s155 = scalar_select %p154, %s153, 1
        %s156 = smul.addr %s155, 8
        %s157 = scalar_lea.vmem %s1, %s156
        %s158 = smul.u32 2, %s19
        %v159 = vld [vmem:[%s131] sm:$0xff]
        %v160 = vld [vmem:[%s131 + $0x8] sm:$0xff]
        %v161 = vld [vmem:[%s131 + $0x10] sm:$0xff]
        %v162 = vld [vmem:[%s131 + $0x18] sm:$0xff]
        %v163 = vld [vmem:[%s131 + $0x20] sm:$0xff]
        %v164 = vld [vmem:[%s131 + $0x28] sm:$0xff]
        %v165 = vld [vmem:[%s131 + $0x30] sm:$0xff]
        %v166 = vld [vmem:[%s131 + $0x38] sm:$0xff]
        %v167 = vlaneseq
        %v168 = vand.u32 %v167, 127
        %v169 = vadd.s32 %v168, 128
        %v170 = vadd.s32 %v168, 256
        %v171 = vadd.s32 %v168, 384
        %v172 = vmax.f32 %v159, %v161
        %v173 = vmax.f32 %v160, %v162
        %v174 = vmax.f32 %v172, %v173
        %175 = vmax.xlane.f32.xlu0 %v174
        %v176 = vpop.xlane.xlu0 %175
        %v177 = vmax.f32 %v163, %v165
        %v178 = vmax.f32 %v164, %v166
        %v179 = vmax.f32 %v177, %v178
        %180 = vmax.xlane.f32.xlu0 %v179
        %v181 = vpop.xlane.xlu0 %180
        %vm182 = vcmp.eq.f32.partialorder %v159, %v176
        %vm183 = vcmp.eq.f32.partialorder %v160, %v176
        %vm184 = vcmp.eq.f32.partialorder %v161, %v176
        %vm185 = vcmp.eq.f32.partialorder %v162, %v176
        %vm186 = vcmp.eq.f32.partialorder %v163, %v181
        %vm187 = vcmp.eq.f32.partialorder %v164, %v181
        %vm188 = vcmp.eq.f32.partialorder %v165, %v181
        %vm189 = vcmp.eq.f32.partialorder %v166, %v181
        %v190 = vsel %vm182, %v168, 512
        %v191 = vsel %vm183, %v169, 512
        %v192 = vsel %vm184, %v170, 512
        %v193 = vsel %vm185, %v171, 512
        %v194 = vsel %vm186, %v168, 512
        %v195 = vsel %vm187, %v169, 512
        %v196 = vsel %vm188, %v170, 512
        %v197 = vsel %vm189, %v171, 512
        %vm198 = vcmp.lt.s32.totalorder %v190, %v192
        %v199 = vsel %vm198, %v190, %v192
        %vm200 = vcmp.lt.s32.totalorder %v191, %v193
        %v201 = vsel %vm200, %v191, %v193
        %vm202 = vcmp.lt.s32.totalorder %v199, %v201
        %v203 = vsel %vm202, %v199, %v201
        %v204 = vand.u32 %v203, 65535
        %v205 = vshra.s32 %v203, 16
        %v206 = vcvt.s32.f32 %v204
        %v207 = vcvt.s32.f32 %v205
        %208 = vmin.xlane.f32.xlu0 %v207
        %v209 = vpop.xlane.xlu0 %208
        %vm210 = vcmp.eq.f32.partialorder %v207, %v209
        %v211 = vsel %vm210, %v206, inf
        %212 = vmin.xlane.f32.xlu0 %v211
        %v213 = vpop.xlane.xlu0 %212
        %v214 = vcvt.f32.s32 %v213
        %v215 = vcvt.f32.s32 %v209
        %v216 = vshll.u32 %v215, 16
        %v217 = vadd.s32 %v216, %v214
        %vm218 = vcmp.lt.s32.totalorder %v194, %v196
        %v219 = vsel %vm218, %v194, %v196
        %vm220 = vcmp.lt.s32.totalorder %v195, %v197
        %v221 = vsel %vm220, %v195, %v197
        %vm222 = vcmp.lt.s32.totalorder %v219, %v221
        %v223 = vsel %vm222, %v219, %v221
        %v224 = vand.u32 %v223, 65535
        %v225 = vshra.s32 %v223, 16
        %v226 = vcvt.s32.f32 %v224
        %v227 = vcvt.s32.f32 %v225
        %228 = vmin.xlane.f32.xlu0 %v227
        %v229 = vpop.xlane.xlu0 %228
        %vm230 = vcmp.eq.f32.partialorder %v227, %v229
        %v231 = vsel %vm230, %v226, inf
        %232 = vmin.xlane.f32.xlu0 %v231
        %v233 = vpop.xlane.xlu0 %232
        %v234 = vcvt.f32.s32 %v233
        %v235 = vcvt.f32.s32 %v229
        %v236 = vshll.u32 %v235, 16
        %v237 = vadd.s32 %v236, %v234
        %s238 = smul.u32 %s20, 512
        %v239 = vstv %s238
        %v240 = vadd.s32 %v217, %v239
        %v241 = vadd.s32 %v237, %v239
        %p242 = scmp.eq.s32.totalorder %s20, 0
        // Predicated region
        $region29: #{greedy_head.1} parent=23 // pred_check
          %p243 = pneg %p242
        $region30: #{greedy_head.1} parent=23 // pred_check_branch
          %245 = sbr.rel (%p243) target = $region32
        $region31: #{greedy_head.1} parent=23 // pred_region
          %vm246 = vcmask 7168
          %247 = vst.msk [vmem:[#allocation2] sm:$0xff] %vm246, %v176
          %248 = vst.msk [vmem:[#allocation2 + $0x8] sm:$0xff] %vm246, %v181
          %249 = vst.msk [vmem:[%s157] sm:$0xff] %vm246, %v240
          %250 = vst.msk [vmem:[%s157 + $0x8] sm:$0xff] %vm246, %v241
        $region32: #{greedy_head.1} parent=23 // pred_fallthru
          _
        %p251 = scmp.gt.s32.totalorder %s20, 0
        // Predicated region
        $region33: #{greedy_head.1} parent=23 // pred_check
          %p252 = pneg %p251
        $region34: #{greedy_head.1} parent=23 // pred_check_branch
          %254 = sbr.rel (%p252) target = $region36
        $region35: #{greedy_head.1} parent=23 // pred_region
          %v255 = vld [vmem:[#allocation2] sm:$0xff]
          %v256 = vld [vmem:[#allocation2 + $0x8] sm:$0xff]
          %vm257 = vcmp.gt.f32.partialorder %v176, %v255
          %vm258 = vcmp.gt.f32.partialorder %v181, %v256
          %v259 = vsel %vm257, %v176, %v255
          %v260 = vsel %vm258, %v181, %v256
          %vm261 = vcmask 7168
          %262 = vst.msk [vmem:[#allocation2] sm:$0xff] %vm261, %v259
          %263 = vst.msk [vmem:[#allocation2 + $0x8] sm:$0xff] %vm261, %v260
          %v264 = vld [vmem:[%s157] sm:$0xff]
          %v265 = vld [vmem:[%s157 + $0x8] sm:$0xff]
          %v266 = vsel %vm257, %v240, %v264
          %v267 = vsel %vm258, %v241, %v265
          %268 = vst.msk [vmem:[%s157] sm:$0xff] %vm261, %v266
          %269 = vst.msk [vmem:[%s157 + $0x8] sm:$0xff] %vm261, %v267
        $region36: #{greedy_head.1} parent=23 // pred_fallthru
          _
        %s270 = smul.u32 2, %s19
        %p271 = scmp.lt.s32.totalorder %s270, 1
        %s272 = scalar_select %p271, %s270, 1
        %s273 = smul.addr %s272, 8
        %s274 = scalar_lea.vmem %s1, %s273
        // Predicated region
        $region37: #{greedy_head.1} parent=23 // pred_check
          %p275 = pneg %p73
        $region38: #{greedy_head.1} parent=23 // pred_check_branch
          %277 = sbr.rel (%p275) target = $region40
        $region39: #{greedy_head.1} parent=23 // pred_region
          %s278 = smul.u32 2, %s19
        $region40: #{greedy_head.1} parent=23 // pred_fallthru
          _
        // Predicated region
        $region41: #{greedy_head.1} parent=23 // pred_check
          %p279 = pneg %p73
        $region42: #{greedy_head.1} parent=23 // pred_check_branch
          %281 = sbr.rel (%p279) target = $region44
        $region43: #{greedy_head.1} parent=23 // pred_region
          %s282 = smul.u32 2, %s19
          %p283 = scmp.lt.s32.totalorder %s282, 1
          %s284 = scalar_select %p283, %s282, 1
          %s285 = smul.addr %s284, 8
          %s286 = scalar_lea.vmem %s1, %s285
        $region44: #{greedy_head.1} parent=23 // pred_fallthru
          _
      $region24: #{greedy_head.1} parent=5 // pred_fallthru
        _
      %p287 = scmp.le.s32.totalorder 2, %s10
      // Predicated region
      $region45: #{greedy_head.1} parent=5 // pred_check
        %p288 = pneg %p287
      $region46: #{greedy_head.1} parent=5 // pred_check_branch
        %290 = sbr.rel (%p288) target = $region48
      $region47: #{greedy_head.1} parent=5 // pred_region
        %s291 = ssub.s32 %s10, 2
      $region48: #{greedy_head.1} parent=5 // pred_fallthru
        _
    $region6: #{greedy_head.1} parent=1 // loop_footer
      %s14 = sadd.s32 1, %s10
    $region7: #{greedy_head.1} parent=1 // loop_footer_branch
      %9 = sbr.rel target = $region3
    $region8: #{greedy_head.1} parent=1 // loop_exit
      _
    %292 = vsyncpa [#allocation4], 1
    %s293 = scalar_lea.sflag [#allocation4], 1
    %294 = vsyncpa %s293, 1

</llo_original>
